<compile_context>
chip_gen: v6e
topology: v6e:2x2x1
jax: 0.10.0
libtpu: 0.0.40
codegen_flags: <defaults>
</compile_context>

<pallas_src>
import jax
import jax.numpy as jnp
from jax.experimental import pallas as pl
from jax.experimental.pallas import tpu as pltpu


def _mlp_kernel(x_ref, w1_ref, b1_ref, w2_ref, b2_ref, w3_ref, b3_ref, o_ref):
    # x: (6, TB) bf16 — features on sublanes, batch on lanes (lane-dense).
    x = x_ref[...]

    # Layer 1: (36, 6) @ (6, TB) -> (36, TB); bf16 MXU operands, f32 accum,
    # bias-add + ReLU stay in f32 on the VPU.
    h1 = jnp.dot(w1_ref[...], x, preferred_element_type=jnp.float32) + b1_ref[...]
    h1 = jnp.maximum(h1, 0.0)

    # Layer 2: (12, 36) @ (36, TB) -> (12, TB)
    h2 = jnp.dot(w2_ref[...], h1.astype(jnp.bfloat16),
                 preferred_element_type=jnp.float32) + b2_ref[...]
    h2 = jnp.maximum(h2, 0.0)

    # Layer 3: (1, 12) @ (12, TB) -> (1, TB) — lane-dense output row.
    out = jnp.dot(w3_ref[...], h2.astype(jnp.bfloat16),
                  preferred_element_type=jnp.float32) + b3_ref[...]

    o_ref[...] = out.astype(o_ref.dtype)


def _round_up(n, m):
    return ((n + m - 1) // m) * m


def mlp_forward(x, params, *, tb=64 * 1024):
    """x: (batch, ...) flattening to 6 features -> logits (batch, 1)."""
    b = x.shape[0]
    x2d = x.reshape(b, -1)                       # nn.Flatten()
    assert x2d.shape[1] == 6, f"expected 6 flattened features, got {x2d.shape[1]}"

    # Single wrapper pass over x: fused cast-to-bf16 + transpose to (6, B).
    xt = x2d.astype(jnp.bfloat16).T              # (6, B) — batch on lanes

    w1, b1, w2, b2, w3, b3 = params
    # Hoist the weight casts out of the kernel (done once, not per grid step).
    w1b = w1.astype(jnp.bfloat16)
    w2b = w2.astype(jnp.bfloat16)
    w3b = w3.astype(jnp.bfloat16)

    # --- batch tiling --------------------------------------------------------
    if b <= max(tb, 128):
        # One full-array block: no (8,128) alignment constraints, no padding.
        tb_eff = b
    else:
        tb_eff = _round_up(min(tb, b), 128)
        # v7x: keep at least 2 grid steps so the "parallel" batch axis can be
        # split across both TensorCores.
        tb_eff = min(tb_eff, _round_up(pl.cdiv(b, 2), 128))
    grid = (pl.cdiv(b, tb_eff),)                 # last block may be partial;
    # out-of-bounds lanes are masked on writeback (columns are independent).

    def resident(a):                             # whole array, VMEM-resident
        return pl.BlockSpec(a.shape, lambda i: (0, 0))

    out_t = pl.pallas_call(
        _mlp_kernel,
        out_shape=jax.ShapeDtypeStruct((1, b), jnp.float32),
        grid=grid,
        in_specs=[pl.BlockSpec((6, tb_eff), lambda i: (0, i)),   # batch-tiled x
                  resident(w1b), resident(b1),
                  resident(w2b), resident(b2),
                  resident(w3b), resident(b3)],
        out_specs=pl.BlockSpec((1, tb_eff), lambda i: (0, i)),   # lane-dense out
        compiler_params=pltpu.CompilerParams(
            dimension_semantics=("parallel",),
            vmem_limit_bytes=32 * 1024 * 1024),
    )(xt, w1b, b1, w2b, b2, w3b, b3)

    return out_t.reshape(b, 1)                   # (1, B) -> (B, 1), free reshape


def mlp_reference(x, params):
    """Pure-JAX reference with identical math (bf16 MXU operands, f32 accum)."""
    w1, b1, w2, b2, w3, b3 = params
    bf, f32 = jnp.bfloat16, jnp.float32
    xt = x.reshape(x.shape[0], -1).astype(bf).T
    h1 = jnp.maximum(jnp.dot(w1.astype(bf), xt, preferred_element_type=f32) + b1, 0.0)
    h2 = jnp.maximum(jnp.dot(w2.astype(bf), h1.astype(bf),
                             preferred_element_type=f32) + b2, 0.0)
    out = jnp.dot(w3.astype(bf), h2.astype(bf), preferred_element_type=f32) + b3
    return out.T                                 # (B, 1)


def init_params(key):
    """Deterministic synthetic params; PyTorch (out, in) weight convention,
    biases shaped (out, 1) for the transposed (features, batch) layout."""
    ks = jax.random.split(key, 6)

    def linear(kw, kb, fan_in, fan_out):
        bound = 1.0 / jnp.sqrt(jnp.float32(fan_in))
        w = jax.random.uniform(kw, (fan_out, fan_in), jnp.float32, -bound, bound)
        bvec = jax.random.uniform(kb, (fan_out, 1), jnp.float32, -bound, bound)
        return w, bvec

    w1, b1 = linear(ks[0], ks[1], 6, 36)
    w2, b2 = linear(ks[2], ks[3], 36, 12)
    w3, b3 = linear(ks[4], ks[5], 12, 1)
    return (w1, b1, w2, b2, w3, b3)


if __name__ == "__main__":
    key = jax.random.PRNGKey(0)
    kparam, kx1, kx2 = jax.random.split(key, 3)

    params = init_params(kparam)

    # Case 1: small batch consistent with the module (Flatten (8,1,6) -> (8,6)),
    # single full-array block.
    x_small = jax.random.normal(kx1, (8, 1, 6), dtype=jnp.float32)
    logits_small = mlp_forward(x_small, params)
    jax.block_until_ready(logits_small)
    ref_small = mlp_reference(x_small, params)
    assert logits_small.shape == (8, 1)
    assert jnp.allclose(logits_small, ref_small, atol=2e-3, rtol=2e-3)

    # Case 2: non-multiple-of-tile batch -> multi-step grid (3 steps) with a
    # masked partial last block (exercises the tiled, multi-core path).
    x_big = jax.random.normal(kx2, (300, 6), dtype=jnp.float32)
    logits_big = mlp_forward(x_big, params, tb=128)
    jax.block_until_ready(logits_big)
    ref_big = mlp_reference(x_big, params)
    assert logits_big.shape == (300, 1)
    assert jnp.allclose(logits_big, ref_big, atol=2e-3, rtol=2e-3)

    print("KERNEL_OK")
</pallas_src>

<mosaic_0001>
module attributes {stable_mosaic.version = 11 : i64} {
  func.func @_mlp_kernel(%arg0: i32, %arg1: memref<6x8xbf16, #tpu.memory_space<vmem>>, %arg2: memref<36x6xbf16, #tpu.memory_space<vmem>>, %arg3: memref<36x1xf32, #tpu.memory_space<vmem>>, %arg4: memref<12x36xbf16, #tpu.memory_space<vmem>>, %arg5: memref<12x1xf32, #tpu.memory_space<vmem>>, %arg6: memref<1x12xbf16, #tpu.memory_space<vmem>>, %arg7: memref<1x1xf32, #tpu.memory_space<vmem>>, %arg8: memref<1x8xf32, #tpu.memory_space<vmem>>) attributes {dimension_semantics = [#tpu.dimension_semantics<parallel>], iteration_bounds = array<i64: 1>, scalar_prefetch = 0 : i64, scratch_operands = 0 : i64, tpu.core_type = #tpu.core_type<tc>, window_params = [{transform_indices = @transform_0, window_bounds = array<i64: 6, 8>}, {pipeline_mode = #tpu.pipeline_mode<synchronous>, transform_indices = @transform_1, window_bounds = array<i64: 36, 6>}, {pipeline_mode = #tpu.pipeline_mode<synchronous>, transform_indices = @transform_2, window_bounds = array<i64: 36, 1>}, {pipeline_mode = #tpu.pipeline_mode<synchronous>, transform_indices = @transform_3, window_bounds = array<i64: 12, 36>}, {pipeline_mode = #tpu.pipeline_mode<synchronous>, transform_indices = @transform_4, window_bounds = array<i64: 12, 1>}, {pipeline_mode = #tpu.pipeline_mode<synchronous>, transform_indices = @transform_5, window_bounds = array<i64: 1, 12>}, {pipeline_mode = #tpu.pipeline_mode<synchronous>, transform_indices = @transform_6, window_bounds = array<i64: 1, 1>}, {transform_indices = @transform_7, window_bounds = array<i64: 1, 8>}]} {
    %c0 = arith.constant 0 : index
    %c0_0 = arith.constant 0 : index
    %0 = vector.load %arg1[%c0, %c0_0] : memref<6x8xbf16, #tpu.memory_space<vmem>>, vector<6x8xbf16>
    %c0_1 = arith.constant 0 : index
    %c0_2 = arith.constant 0 : index
    %1 = vector.load %arg2[%c0_1, %c0_2] : memref<36x6xbf16, #tpu.memory_space<vmem>>, vector<36x6xbf16>
    %cst = arith.constant dense<0.000000e+00> : vector<36x8xf32>
    %2 = tpu.matmul %1, %0, %cst {dimension_numbers = #tpu.dot_dimension_numbers<[1], [0], [0], [1], [0, 0, 1, 1], [], []>} : vector<36x6xbf16>, vector<6x8xbf16>, vector<36x8xf32> -> vector<36x8xf32>
    %c0_3 = arith.constant 0 : index
    %c0_4 = arith.constant 0 : index
    %3 = vector.load %arg3[%c0_3, %c0_4] : memref<36x1xf32, #tpu.memory_space<vmem>>, vector<36x1xf32>
    %4 = vector.broadcast %3 : vector<36x1xf32> to vector<36x8xf32>
    %5 = arith.addf %2, %4 : vector<36x8xf32>
    %cst_5 = arith.constant 0.000000e+00 : f32
    %6 = vector.broadcast %cst_5 : f32 to vector<36x8xf32>
    %7 = arith.maximumf %5, %6 : vector<36x8xf32>
    %c0_6 = arith.constant 0 : index
    %c0_7 = arith.constant 0 : index
    %8 = vector.load %arg4[%c0_6, %c0_7] : memref<12x36xbf16, #tpu.memory_space<vmem>>, vector<12x36xbf16>
    %9 = arith.truncf %7 : vector<36x8xf32> to vector<36x8xbf16>
    %cst_8 = arith.constant dense<0.000000e+00> : vector<12x8xf32>
    %10 = tpu.matmul %8, %9, %cst_8 {dimension_numbers = #tpu.dot_dimension_numbers<[1], [0], [0], [1], [0, 0, 1, 1], [], []>} : vector<12x36xbf16>, vector<36x8xbf16>, vector<12x8xf32> -> vector<12x8xf32>
    %c0_9 = arith.constant 0 : index
    %c0_10 = arith.constant 0 : index
    %11 = vector.load %arg5[%c0_9, %c0_10] : memref<12x1xf32, #tpu.memory_space<vmem>>, vector<12x1xf32>
    %12 = vector.broadcast %11 : vector<12x1xf32> to vector<12x8xf32>
    %13 = arith.addf %10, %12 : vector<12x8xf32>
    %cst_11 = arith.constant 0.000000e+00 : f32
    %14 = vector.broadcast %cst_11 : f32 to vector<12x8xf32>
    %15 = arith.maximumf %13, %14 : vector<12x8xf32>
    %c0_12 = arith.constant 0 : index
    %c0_13 = arith.constant 0 : index
    %16 = vector.load %arg6[%c0_12, %c0_13] : memref<1x12xbf16, #tpu.memory_space<vmem>>, vector<1x12xbf16>
    %17 = arith.truncf %15 : vector<12x8xf32> to vector<12x8xbf16>
    %cst_14 = arith.constant dense<0.000000e+00> : vector<1x8xf32>
    %18 = tpu.matmul %16, %17, %cst_14 {dimension_numbers = #tpu.dot_dimension_numbers<[1], [0], [0], [1], [0, 0, 1, 1], [], []>} : vector<1x12xbf16>, vector<12x8xbf16>, vector<1x8xf32> -> vector<1x8xf32>
    %c0_15 = arith.constant 0 : index
    %c0_16 = arith.constant 0 : index
    %19 = vector.load %arg7[%c0_15, %c0_16] : memref<1x1xf32, #tpu.memory_space<vmem>>, vector<1x1xf32>
    %20 = vector.broadcast %19 : vector<1x1xf32> to vector<1x8xf32>
    %21 = arith.addf %18, %20 : vector<1x8xf32>
    %c0_17 = arith.constant 0 : index
    %c0_18 = arith.constant 0 : index
    %22 = vector.load %arg8[%c0_17, %c0_18] : memref<1x8xf32, #tpu.memory_space<vmem>>, vector<1x8xf32>
    tpu.vector_store %arg8[%c0_17, %c0_18], %21 {strides = array<i32>} : memref<1x8xf32, #tpu.memory_space<vmem>>, vector<1x8xf32>,
    return
  }
  func.func @transform_0(%arg0: i32) -> (i32, i32) {
    %c0_i32 = arith.constant 0 : i32
    %c0_i32_0 = arith.constant 0 : i32
    return %c0_i32, %arg0 : i32, i32
  }
  func.func @transform_1(%arg0: i32) -> (i32, i32) {
    %c0_i32 = arith.constant 0 : i32
    %c0_i32_0 = arith.constant 0 : i32
    %c0_i32_1 = arith.constant 0 : i32
    return %c0_i32, %c0_i32_0 : i32, i32
  }
  func.func @transform_2(%arg0: i32) -> (i32, i32) {
    %c0_i32 = arith.constant 0 : i32
    %c0_i32_0 = arith.constant 0 : i32
    %c0_i32_1 = arith.constant 0 : i32
    return %c0_i32, %c0_i32_0 : i32, i32
  }
  func.func @transform_3(%arg0: i32) -> (i32, i32) {
    %c0_i32 = arith.constant 0 : i32
    %c0_i32_0 = arith.constant 0 : i32
    %c0_i32_1 = arith.constant 0 : i32
    return %c0_i32, %c0_i32_0 : i32, i32
  }
  func.func @transform_4(%arg0: i32) -> (i32, i32) {
    %c0_i32 = arith.constant 0 : i32
    %c0_i32_0 = arith.constant 0 : i32
    %c0_i32_1 = arith.constant 0 : i32
    return %c0_i32, %c0_i32_0 : i32, i32
  }
  func.func @transform_5(%arg0: i32) -> (i32, i32) {
    %c0_i32 = arith.constant 0 : i32
    %c0_i32_0 = arith.constant 0 : i32
    %c0_i32_1 = arith.constant 0 : i32
    return %c0_i32, %c0_i32_0 : i32, i32
  }
  func.func @transform_6(%arg0: i32) -> (i32, i32) {
    %c0_i32 = arith.constant 0 : i32
    %c0_i32_0 = arith.constant 0 : i32
    %c0_i32_1 = arith.constant 0 : i32
    return %c0_i32, %c0_i32_0 : i32, i32
  }
  func.func @transform_7(%arg0: i32) -> (i32, i32) {
    %c0_i32 = arith.constant 0 : i32
    %c0_i32_0 = arith.constant 0 : i32
    return %c0_i32, %arg0 : i32, i32
  }
}

</mosaic_0001>

<llo_original>
// kernel: tpu_custom_call.1
$region0: #{tpu_custom_call.1}
  #allocation0 [shape = 'u32[]', space=smem, size = 0x4, offset = 0x4, fixed_abs, tag = 'smem constant byte address 0x4 - core index']
  #allocation1 [shape = 'u32[144,128]{1,0:T(1,128)}', space=vmem, size = 0x12000, scoped, tag = 'internal scratch']
  #allocation2 [shape = 'f32[1,1]{1,0:T(1,128)S(1)}', space=vmem, size = 0x200, scoped, tag = 'scoped memory for tpu_custom_call.1']
  %s0 = inlined_call_operand.vmem [shape: bf16[6,8], index: 0, kind: input, shape index: {}]
  %s1 = inlined_call_operand.vmem [shape: bf16[36,6], index: 1, kind: input, shape index: {}]
  %s2 = inlined_call_operand.vmem [shape: f32[36,1], index: 2, kind: input, shape index: {}]
  %s3 = inlined_call_operand.vmem [shape: bf16[12,36], index: 3, kind: input, shape index: {}]
  %s4 = inlined_call_operand.vmem [shape: f32[12,1], index: 4, kind: input, shape index: {}]
  %s5 = inlined_call_operand.vmem [shape: bf16[1,12], index: 5, kind: input, shape index: {}]
  %s6 = inlined_call_operand.<no memory space> [shape: f32[1,1], index: 6, kind: input, shape index: {}]
  %s7 = inlined_call_operand.hbm [shape: f32[1,8], index: 7, kind: output, shape index: {}]
  %s8 = sld [smem:[#allocation0]]
  $region38: #{tpu_custom_call.1} parent=0
    _
  %s10 = ssub.s32 1, %s8
  %s11 = scalar_select 0, %s10, %s8
  %v12 = vstv %s6
  %13 = vst [vmem:[#allocation2] sm:$0x1] %v12
  $region1: #{tpu_custom_call.1} parent=0
    #allocation3 [shape = 'u8[512]{0}', space=vmem, size = 0x400, scoped, tag = 'output window, operand 0, single buffered']
    #allocation4 [shape = 's32[1]{0}', space=sflag, size = 0x4, scoped, tag = 'scoped memory for tpu_custom_call.1']
    %14 = vsyncpa [#allocation4], 0
    // Predicated region
    $region2: #{tpu_custom_call.1} parent=1 // pred_check
      _
    $region3: #{tpu_custom_call.1} parent=1 // pred_check_branch
      %16 = sbr.rel (0) target = $region5
    $region4: #{tpu_custom_call.1} parent=1 // pred_region
      _
    $region5: #{tpu_custom_call.1} parent=1 // pred_fallthru
      _
    // Predicated region
    $region6: #{tpu_custom_call.1} parent=1 // pred_check
      _
    $region7: #{tpu_custom_call.1} parent=1 // pred_check_branch
      %18 = sbr.rel (0) target = $region9
    $region8: #{tpu_custom_call.1} parent=1 // pred_region
      _
    $region9: #{tpu_custom_call.1} parent=1 // pred_fallthru
      _
    // Predicated region
    $region10: #{tpu_custom_call.1} parent=1 // pred_check
      _
    $region11: #{tpu_custom_call.1} parent=1 // pred_check_branch
      %20 = sbr.rel (0) target = $region13
    $region12: #{tpu_custom_call.1} parent=1 // pred_region
      _
    $region13: #{tpu_custom_call.1} parent=1 // pred_fallthru
      _
    // Predicated region
    $region14: #{tpu_custom_call.1} parent=1 // pred_check
      _
    $region15: #{tpu_custom_call.1} parent=1 // pred_check_branch
      %22 = sbr.rel (0) target = $region17
    $region16: #{tpu_custom_call.1} parent=1 // pred_region
      _
    $region17: #{tpu_custom_call.1} parent=1 // pred_fallthru
      _
    // Predicated region
    $region18: #{tpu_custom_call.1} parent=1 // pred_check
      _
    $region19: #{tpu_custom_call.1} parent=1 // pred_check_branch
      %24 = sbr.rel (0) target = $region21
    $region20: #{tpu_custom_call.1} parent=1 // pred_region
      _
    $region21: #{tpu_custom_call.1} parent=1 // pred_fallthru
      _
    // Predicated region
    $region22: #{tpu_custom_call.1} parent=1 // pred_check
      _
    $region23: #{tpu_custom_call.1} parent=1 // pred_check_branch
      %26 = sbr.rel (0) target = $region25
    $region24: #{tpu_custom_call.1} parent=1 // pred_region
      _
    $region25: #{tpu_custom_call.1} parent=1 // pred_fallthru
      _
    // Predicated region
    $region26: #{tpu_custom_call.1} parent=1 // pred_check
      _
    $region27: #{tpu_custom_call.1} parent=1 // pred_check_branch
      %28 = sbr.rel (0) target = $region29
    $region28: #{tpu_custom_call.1} parent=1 // pred_region
      _
    $region29: #{tpu_custom_call.1} parent=1 // pred_fallthru
      _
    %v30 = vld [vmem:[%s0] sm:$0x7]
    %v31 = vld [vmem:[%s1] sm:$0xf]
    %v32 = vld [vmem:[%s1 + $0x4] sm:$0xf]
    %v33 = vld [vmem:[%s1 + $0x8] sm:$0xf]
    %v34 = vld [vmem:[%s1 + $0xc] sm:$0xf]
    %v35 = vld [vmem:[%s1 + $0x10] sm:$0x3]
    %v36 = vld [vmem:[%s2] sm:$0xff]
    %v37 = vld [vmem:[%s2 + $0x8] sm:$0xff]
    %v38 = vld [vmem:[%s2 + $0x10] sm:$0xff]
    %v39 = vld [vmem:[%s2 + $0x18] sm:$0xff]
    %v40 = vld [vmem:[%s2 + $0x20] sm:$0xf]
    %42 = vset.pattern.permute.xlu0 0
    %43 = vperm.xlu0 %42, %v36
    %v44 = vpop.permute.xlu0 %43
    %47 = vset.pattern.permute.xlu0 0
    %48 = vperm.xlu0 %47, %v37
    %v49 = vpop.permute.xlu0 %48
    %52 = vset.pattern.permute.xlu0 0
    %53 = vperm.xlu0 %52, %v38
    %v54 = vpop.permute.xlu0 %53
    %57 = vset.pattern.permute.xlu0 0
    %58 = vperm.xlu0 %57, %v39
    %v59 = vpop.permute.xlu0 %58
    %62 = vset.pattern.permute.xlu0 0
    %63 = vperm.xlu0 %62, %v40
    %v64 = vpop.permute.xlu0 %63
    %v71 = vunpack.c.l.b16 %v31
    %v72 = vunpack.c.l.b16 %v32
    %v73 = vunpack.c.l.b16 %v33
    %v74 = vunpack.c.l.b16 %v34
    %v75 = vunpack.c.l.b16 %v35
    %v76 = vpack.c.b16 %v72, %v71
    %v77 = vpack.c.b16 %v74, %v73
    %v78 = vpack.c.b16 %v75, %v75
    %vm79 = vcmask 48128
    %v81 = vsel %vm79, %v76, 0
    %v84 = vsel %vm79, %v77, 0
    %v87 = vsel %vm79, %v78, 0
    %vm89 = vcmask 1042432
    %v91 = vsel %vm89, %v30, 0
    %93 = vmatprep.subr.bf16.mxu0 0
    %94 = vmatpush1.bf16.msra.mxu0 0
    %95 = vmatprep.subr.bf16.mxu0 0
    %96 = vmatpush1.bf16.msra.mxu0 0
    %97 = vmatprep.subr.bf16.mxu0 0
    %98 = vmatpush1.bf16.msra.mxu0 0
    %99 = vmatprep.subr.bf16.mxu0 0
    %100 = vmatpush1.bf16.msra.mxu0 0
    %101 = vmatprep.subr.bf16.mxu0 0
    %102 = vmatpush1.bf16.msra.mxu0 0
    %103 = vmatprep.subr.bf16.mxu0 0
    %104 = vmatpush1.bf16.msra.mxu0 0
    %105 = vmatprep.subr.bf16.mxu0 0
    %106 = vmatpush1.bf16.msra.mxu0 0
    %107 = vmatprep.subr.bf16.mxu0 0
    %108 = vmatpush1.bf16.msra.mxu0 %v91
    %109 = vmatprep.subr.bf16.mxu0 0
    %110 = vmatpush2.bf16.msra.mxu0 0
    %111 = vmatprep.subr.bf16.mxu0 0
    %112 = vmatpush2.bf16.msra.mxu0 0
    %113 = vmatprep.subr.bf16.mxu0 0
    %114 = vmatpush2.bf16.msra.mxu0 0
    %115 = vmatprep.subr.bf16.mxu0 0
    %116 = vmatpush2.bf16.msra.mxu0 0
    %117 = vmatprep.subr.bf16.mxu0 0
    %118 = vmatpush2.bf16.msra.mxu0 0
    %119 = vmatprep.subr.bf16.mxu0 0
    %120 = vmatpush2.bf16.msra.mxu0 0
    %121 = vmatprep.subr.bf16.mxu0 0
    %122 = vmatpush2.bf16.msra.mxu0 0
    %123 = vmatprep.subr.bf16.mxu0 0
    %124 = vmatpush2.bf16.msra.mxu0 0
    %125 = vmatprep.mubr.bf16.mxu0 0
    %126 = vmatmul.mubr.bf16.gmra.mxu0 %v81
    %v127 = vpop.f32.mrf.mxu0
    %v128 = vadd.f32 %v44, %v127
    %v129 = vpop.f32.mrf.mxu0
    %v130 = vpop.f32.mrf.mxu0
    %v131 = vadd.f32 %v49, %v130
    %v132 = vpop.f32.mrf.mxu0
    %133 = vmatprep.mubr.bf16.mxu0 0
    %134 = vmatmul.mubr.bf16.gmra.mxu0 %v84
    %v135 = vpop.f32.mrf.mxu0
    %v136 = vadd.f32 %v54, %v135
    %v137 = vpop.f32.mrf.mxu0
    %v138 = vpop.f32.mrf.mxu0
    %v139 = vadd.f32 %v59, %v138
    %v140 = vpop.f32.mrf.mxu0
    %141 = vmatprep.mubr.bf16.mxu0 0
    %142 = vmatmul.mubr.bf16.gmra.mxu0 %v87
    %v143 = vpop.f32.mrf.mxu0
    %v144 = vadd.f32 %v64, %v143
    %v145 = vpop.f32.mrf.mxu0
    %v146 = vpop.f32.mrf.mxu0
    %v147 = vpop.f32.mrf.mxu0
    %148 = vdwg.mxu0
    %v149 = vmax.f32 %v128, 0.0
    %v150 = vmax.f32 %v131, 0.0
    %v151 = vmax.f32 %v136, 0.0
    %v152 = vmax.f32 %v139, 0.0
    %v153 = vmax.f32 %v144, 0.0
    %v154 = vld [vmem:[%s3] sm:$0xf]
    %v155 = vld [vmem:[%s3 + $0x4] sm:$0x3]
    %v156 = vpack.c.bf16 %v150, %v149
    %v157 = vpack.c.bf16 %v152, %v151
    %v158 = vpack.c.bf16 %v153, %v153
    %v159 = vld [vmem:[%s4] sm:$0xff]
    %v160 = vld [vmem:[%s4 + $0x8] sm:$0xf]
    %162 = vset.pattern.permute.xlu0 0
    %163 = vperm.xlu0 %162, %v159
    %v164 = vpop.permute.xlu0 %163
    %167 = vset.pattern.permute.xlu0 0
    %168 = vperm.xlu0 %167, %v160
    %v169 = vpop.permute.xlu0 %168
    %v173 = vunpack.c.l.b16 %v154
    %v174 = vunpack.c.l.b16 %v155
    %v175 = vpack.c.b16 %v174, %v173
    %vm176 = vcmask 293888
    %v178 = vsel %vm176, %v175, 0
    %vm180 = vcmask 1041408
    %v182 = vsel %vm180, %v158, 0
    %184 = vmatprep.subr.bf16.mxu0 0
    %185 = vmatpush1.bf16.msra.mxu0 0
    %186 = vmatprep.subr.bf16.mxu0 0
    %187 = vmatpush1.bf16.msra.mxu0 0
    %188 = vmatprep.subr.bf16.mxu0 0
    %189 = vmatpush1.bf16.msra.mxu0 0
    %190 = vmatprep.subr.bf16.mxu0 0
    %191 = vmatpush1.bf16.msra.mxu0 0
    %192 = vmatprep.subr.bf16.mxu0 0
    %193 = vmatpush1.bf16.msra.mxu0 0
    %194 = vmatprep.subr.bf16.mxu0 0
    %195 = vmatpush1.bf16.msra.mxu0 %v182
    %196 = vmatprep.subr.bf16.mxu0 0
    %197 = vmatpush1.bf16.msra.mxu0 %v157
    %198 = vmatprep.subr.bf16.mxu0 0
    %199 = vmatpush1.bf16.msra.mxu0 %v156
    %200 = vmatprep.subr.bf16.mxu0 0
    %201 = vmatpush2.bf16.msra.mxu0 0
    %202 = vmatprep.subr.bf16.mxu0 0
    %203 = vmatpush2.bf16.msra.mxu0 0
    %204 = vmatprep.subr.bf16.mxu0 0
    %205 = vmatpush2.bf16.msra.mxu0 0
    %206 = vmatprep.subr.bf16.mxu0 0
    %207 = vmatpush2.bf16.msra.mxu0 0
    %208 = vmatprep.subr.bf16.mxu0 0
    %209 = vmatpush2.bf16.msra.mxu0 0
    %210 = vmatprep.subr.bf16.mxu0 0
    %211 = vmatpush2.bf16.msra.mxu0 0
    %212 = vmatprep.subr.bf16.mxu0 0
    %213 = vmatpush2.bf16.msra.mxu0 0
    %214 = vmatprep.subr.bf16.mxu0 0
    %215 = vmatpush2.bf16.msra.mxu0 0
    %216 = vmatprep.mubr.bf16.mxu0 0
    %217 = vmatmul.mubr.bf16.gmra.mxu0 %v178
    %v218 = vpop.f32.mrf.mxu0
    %v219 = vadd.f32 %v164, %v218
    %v220 = vpop.f32.mrf.mxu0
    %v221 = vpop.f32.mrf.mxu0
    %v222 = vadd.f32 %v169, %v221
    %v223 = vpop.f32.mrf.mxu0
    %224 = vdwg.mxu0
    %v225 = vmax.f32 %v219, 0.0
    %v226 = vmax.f32 %v222, 0.0
    %v227 = vld [vmem:[%s5] sm:$0x1]
    %v228 = vpack.c.bf16 %v226, %v225
    %v229 = vld [vmem:[#allocation2] sm:$0x1]
    %231 = vset.pattern.permute.xlu0 0
    %232 = vperm.xlu0 %231, %v229
    %v233 = vpop.permute.xlu0 %232
    %v235 = vlaneseq
    %v236 = vshrl.u32 %v235, 7
    %v237 = vsub.s32 0, %v236
    %v238 = vrot.slane %v233, %v237
    %vm239 = vcmask 97280
    %v241 = vsel %vm239, %v227, 0
    %vm243 = vcmask 1045504
    %v245 = vsel %vm243, %v228, 0
    %247 = vmatprep.subr.bf16.mxu0 0
    %248 = vmatpush1.bf16.msra.mxu0 0
    %249 = vmatprep.subr.bf16.mxu0 0
    %250 = vmatpush1.bf16.msra.mxu0 0
    %251 = vmatprep.subr.bf16.mxu0 0
    %252 = vmatpush1.bf16.msra.mxu0 0
    %253 = vmatprep.subr.bf16.mxu0 0
    %254 = vmatpush1.bf16.msra.mxu0 0
    %255 = vmatprep.subr.bf16.mxu0 0
    %256 = vmatpush1.bf16.msra.mxu0 0
    %257 = vmatprep.subr.bf16.mxu0 0
    %258 = vmatpush1.bf16.msra.mxu0 0
    %259 = vmatprep.subr.bf16.mxu0 0
    %260 = vmatpush1.bf16.msra.mxu0 0
    %261 = vmatprep.subr.bf16.mxu0 0
    %262 = vmatpush1.bf16.msra.mxu0 %v245
    %263 = vmatprep.subr.bf16.mxu0 0
    %264 = vmatpush2.bf16.msra.mxu0 0
    %265 = vmatprep.subr.bf16.mxu0 0
    %266 = vmatpush2.bf16.msra.mxu0 0
    %267 = vmatprep.subr.bf16.mxu0 0
    %268 = vmatpush2.bf16.msra.mxu0 0
    %269 = vmatprep.subr.bf16.mxu0 0
    %270 = vmatpush2.bf16.msra.mxu0 0
    %271 = vmatprep.subr.bf16.mxu0 0
    %272 = vmatpush2.bf16.msra.mxu0 0
    %273 = vmatprep.subr.bf16.mxu0 0
    %274 = vmatpush2.bf16.msra.mxu0 0
    %275 = vmatprep.subr.bf16.mxu0 0
    %276 = vmatpush2.bf16.msra.mxu0 0
    %277 = vmatprep.subr.bf16.mxu0 0
    %278 = vmatpush2.bf16.msra.mxu0 0
    %279 = vmatprep.mubr.bf16.mxu0 0
    %280 = vmatmul.mubr.bf16.gmra.mxu0 %v241
    %v281 = vpop.f32.mrf.mxu0
    %v282 = vadd.f32 %v238, %v281
    %v283 = vpop.f32.mrf.mxu0
    %v284 = vpop.f32.mrf.mxu0
    %v285 = vpop.f32.mrf.mxu0
    %286 = vdwg.mxu0
    %vm287 = vcmask 57344
    %288 = vst.msk [vmem:[#allocation3] sm:$0x1] %vm287, %v282
    // Predicated region
    $region30: #{tpu_custom_call.1} parent=1 // pred_check
      _
    $region31: #{tpu_custom_call.1} parent=1 // pred_check_branch
      %290 = sbr.rel (0) target = $region33
    $region32: #{tpu_custom_call.1} parent=1 // pred_region
      %s292 = ssub.s32 16, 16
      %293 = vsyncadd [#allocation4], %s292
      %s295 = sshll.u32 [#allocation3], 4
      %s296 = int_to_ptr.vmem [resolvable:$true] %s295
      %298 = dma.vmem_to_hbm [thread:$0]  %s296, 16, %s7, [#allocation4]
    $region33: #{tpu_custom_call.1} parent=1 // pred_fallthru
      _
    // Predicated region
    $region34: #{tpu_custom_call.1} parent=1 // pred_check
      _
    $region35: #{tpu_custom_call.1} parent=1 // pred_check_branch
      %300 = sbr.rel (0) target = $region37
    $region36: #{tpu_custom_call.1} parent=1 // pred_region
      %301 = dma.done [#allocation4], 16
    $region37: #{tpu_custom_call.1} parent=1 // pred_fallthru
      _
    %302 = vsyncpa [#allocation4], 1

</llo_original>
